<compile_context>
chip_gen: v5e
topology: v5e:2x2
jax: 0.10.0
libtpu: 0.0.40
codegen_flags: <defaults>
</compile_context>

<pallas_src>
import jax
import jax.numpy as jnp
from jax import lax
from jax.experimental import pallas as pl
from jax.experimental.pallas import tpu as pltpu

N_STATE = 4
N_HIDDEN = 50
N_ACTIONS = 2

_LANE = 128
_CHUNK = 256          # lanes per inner chunk: caps live vregs (~14 for h)
_TILE = 2048          # lanes per grid step for large batches
_BUCKETS = (128, 512, 2048)   # single-step padded-batch buckets


def _round_up(x, m):
    return ((x + m - 1) // m) * m


def _pick_tiling(B):
    """Return (padded_batch, batch_tile). Small batches -> one grid step at a
    bucketed size; large batches -> 2048-lane tiles with an even step count."""
    for b in _BUCKETS:
        if B <= b:
            return b, b
    tb = _TILE
    return _round_up(B, 2 * tb), tb   # even number of steps (v7x 2 TCs)


def _net_kernel(xT_ref, w1_ref, b1_ref, w2_ref, b2_ref, oT_ref):
    # xT_ref : [N_STATE, tb]          states, batch on lanes
    # w1_ref : [N_HIDDEN, N_STATE]    fc1.weight (PyTorch [out, in] layout)
    # b1_ref : [N_HIDDEN, 1]
    # w2_ref : [N_HIDDEN, N_ACTIONS]  (transpose of PyTorch out.weight)
    # b2_ref : [N_ACTIONS, 1]
    # oT_ref : [N_ACTIONS, tb]        Q-values, batch on lanes
    w1 = w1_ref[...]                     # [50, 4]
    b1 = b1_ref[...]                     # [50, 1]
    w2 = w2_ref[...]                     # [50, 2]
    b2 = b2_ref[...]                     # [2, 1]

    tb = xT_ref.shape[-1]                # static (block shape)
    chunk = min(_CHUNK, tb)
    n_chunks = tb // chunk               # tb is always a multiple of chunk

    def body(c, carry):
        off = pl.multiple_of(c * chunk, chunk)
        x = xT_ref[:, pl.ds(off, chunk)]            # [4, chunk]

        # fc1 as N_STATE VPU rank-1 updates (outer products), f32 throughout.
        h = w1[:, 0:1] * x[0:1, :]                  # [50, chunk]
        for k in range(1, N_STATE):                 # static unroll (4 taps)
            h = h + w1[:, k:k + 1] * x[k:k + 1, :]
        h = jnp.maximum(h + b1, 0.0)                # bias + ReLU

        # output layer: N_ACTIONS sublane (XLU) reductions, no MXU round-trip.
        rows = [jnp.sum(w2[:, a:a + 1] * h, axis=0, keepdims=True)  # [1, chunk]
                for a in range(N_ACTIONS)]
        oT_ref[:, pl.ds(off, chunk)] = jnp.concatenate(rows, axis=0) + b2
        return carry

    lax.fori_loop(0, n_chunks, body, 0, unroll=True)


def net_forward(x, w1, b1, w2, b2):
    """x: [B, N_STATE] f32; w1: [N_HIDDEN, N_STATE] (PyTorch fc1.weight layout);
    b1: [N_HIDDEN]; w2: [N_HIDDEN, N_ACTIONS] (TRANSPOSE of PyTorch out.weight);
    b2: [N_ACTIONS].  Returns Q-values [B, N_ACTIONS]."""
    B = x.shape[0]
    Bp, tb = _pick_tiling(B)
    grid = (Bp // tb,)

    # Lane-dense batch; the pad+transpose is allowed to fuse into the kernel
    # input DMA via allow_input_fusion below (no separate HBM pass under jit).
    xT = jnp.pad(x, ((0, Bp - B), (0, 0))).T        # [N_STATE, Bp]
    b1c = b1.reshape(N_HIDDEN, 1)
    b2c = b2.reshape(N_ACTIONS, 1)

    oT = pl.pallas_call(
        _net_kernel,
        out_shape=jax.ShapeDtypeStruct((N_ACTIONS, Bp), jnp.float32),
        grid=grid,
        in_specs=[
            # batch-tiled activations
            pl.BlockSpec((N_STATE, tb), lambda i: (0, i)),
            # grid-invariant (VMEM-resident) weights / biases
            pl.BlockSpec((N_HIDDEN, N_STATE), lambda i: (0, 0)),
            pl.BlockSpec((N_HIDDEN, 1), lambda i: (0, 0)),
            pl.BlockSpec((N_HIDDEN, N_ACTIONS), lambda i: (0, 0)),
            pl.BlockSpec((N_ACTIONS, 1), lambda i: (0, 0)),
        ],
        out_specs=pl.BlockSpec((N_ACTIONS, tb), lambda i: (0, i)),
        compiler_params=pltpu.CompilerParams(
            dimension_semantics=("parallel",),          # batch axis -> v7x 2 TCs
            allow_input_fusion=[True, False, False, False, False],
        ),
    )(xT, w1, b1c, w2, b2c)

    # Padded columns carry w2·ReLU(b1)+b2 garbage; slice before any reduction.
    return oT[:, :B].T                               # back to [B, N_ACTIONS]


def init_params(key):
    """Deterministic synthetic init matching Net.__init__.
    w1 is stored exactly like PyTorch fc1.weight ([out, in] = [50, 4]);
    w2 is stored as [in, out] = [50, 2] (transpose of PyTorch out.weight)."""
    k1, k2, k3, k4 = jax.random.split(key, 4)
    # weight.data.normal_(0, 0.1)
    w1 = 0.1 * jax.random.normal(k1, (N_HIDDEN, N_STATE), dtype=jnp.float32)
    w2 = 0.1 * jax.random.normal(k2, (N_HIDDEN, N_ACTIONS), dtype=jnp.float32)
    # nn.Linear default bias init: U(-1/sqrt(fan_in), 1/sqrt(fan_in))
    bound1 = 1.0 / jnp.sqrt(jnp.float32(N_STATE))
    bound2 = 1.0 / jnp.sqrt(jnp.float32(N_HIDDEN))
    b1 = jax.random.uniform(k3, (N_HIDDEN,), minval=-bound1, maxval=bound1,
                            dtype=jnp.float32)
    b2 = jax.random.uniform(k4, (N_ACTIONS,), minval=-bound2, maxval=bound2,
                            dtype=jnp.float32)
    return w1, b1, w2, b2


if __name__ == "__main__":
    key = jax.random.PRNGKey(0)
    kx, kp = jax.random.split(key)
    w1, b1, w2, b2 = init_params(kp)

    net = jax.jit(net_forward)

    def reference(x):
        return jnp.maximum(x @ w1.T + b1, 0.0) @ w2 + b2

    # Small batch (single CartPole decision step) -> bucket 128, 1 step, 1 chunk.
    x_small = jax.random.normal(kx, (2, N_STATE), dtype=jnp.float32)
    out_small = jax.block_until_ready(net(x_small, w1, b1, w2, b2))
    assert out_small.shape == (2, N_ACTIONS)
    assert jnp.allclose(out_small, reference(x_small), atol=1e-5), "mismatch (B=2)"

    # Mid batch -> bucket 512, single grid step, 2 inner chunks.
    x_mid = jax.random.normal(kx, (300, N_STATE), dtype=jnp.float32)
    out_mid = jax.block_until_ready(net(x_mid, w1, b1, w2, b2))
    assert out_mid.shape == (300, N_ACTIONS)
    assert jnp.allclose(out_mid, reference(x_mid), atol=1e-4), "mismatch (B=300)"

    # DQN replay batch -> padded to 4096: 2 x 2048-lane steps (even for v7x),
    # 8 inner 256-lane chunks per step.
    x_big = jax.random.normal(kx, (2500, N_STATE), dtype=jnp.float32)
    out_big = jax.block_until_ready(net(x_big, w1, b1, w2, b2))
    assert out_big.shape == (2500, N_ACTIONS)
    assert jnp.allclose(out_big, reference(x_big), atol=1e-4), "mismatch (B=2500)"

    print("KERNEL_OK")
</pallas_src>

<mosaic_0001>
module attributes {stable_mosaic.version = 11 : i64} {
  func.func @_net_kernel(%arg0: i32, %arg1: memref<4x128xf32, #tpu.memory_space<vmem>>, %arg2: memref<50x4xf32, #tpu.memory_space<vmem>>, %arg3: memref<50x1xf32, #tpu.memory_space<vmem>>, %arg4: memref<50x2xf32, #tpu.memory_space<vmem>>, %arg5: memref<2x1xf32, #tpu.memory_space<vmem>>, %arg6: memref<2x128xf32, #tpu.memory_space<vmem>>) attributes {dimension_semantics = [#tpu.dimension_semantics<parallel>], iteration_bounds = array<i64: 1>, scalar_prefetch = 0 : i64, scratch_operands = 0 : i64, tpu.core_type = #tpu.core_type<tc>, window_params = [{transform_indices = @transform_0, window_bounds = array<i64: 4, 128>}, {pipeline_mode = #tpu.pipeline_mode<synchronous>, transform_indices = @transform_1, window_bounds = array<i64: 50, 4>}, {pipeline_mode = #tpu.pipeline_mode<synchronous>, transform_indices = @transform_2, window_bounds = array<i64: 50, 1>}, {pipeline_mode = #tpu.pipeline_mode<synchronous>, transform_indices = @transform_3, window_bounds = array<i64: 50, 2>}, {pipeline_mode = #tpu.pipeline_mode<synchronous>, transform_indices = @transform_4, window_bounds = array<i64: 2, 1>}, {transform_indices = @transform_5, window_bounds = array<i64: 2, 128>}]} {
    %c0 = arith.constant 0 : index
    %c0_0 = arith.constant 0 : index
    %0 = vector.load %arg2[%c0, %c0_0] : memref<50x4xf32, #tpu.memory_space<vmem>>, vector<50x4xf32>
    %c0_1 = arith.constant 0 : index
    %c0_2 = arith.constant 0 : index
    %1 = vector.load %arg3[%c0_1, %c0_2] : memref<50x1xf32, #tpu.memory_space<vmem>>, vector<50x1xf32>
    %c0_3 = arith.constant 0 : index
    %c0_4 = arith.constant 0 : index
    %2 = vector.load %arg4[%c0_3, %c0_4] : memref<50x2xf32, #tpu.memory_space<vmem>>, vector<50x2xf32>
    %c0_5 = arith.constant 0 : index
    %c0_6 = arith.constant 0 : index
    %3 = vector.load %arg5[%c0_5, %c0_6] : memref<2x1xf32, #tpu.memory_space<vmem>>, vector<2x1xf32>
    %c0_i32 = arith.constant 0 : i32
    %c128_i32 = arith.constant 128 : i32
    %4 = arith.muli %c0_i32, %c128_i32 : i32
    %5 = tpu.assume_multiple %4, 128 : i32
    %c0_7 = arith.constant 0 : index
    %6 = arith.index_cast %5 : i32 to index
    %7 = vector.load %arg1[%c0_7, %6] : memref<4x128xf32, #tpu.memory_space<vmem>>, vector<4x128xf32>
    %8 = vector.extract_strided_slice %0 {offsets = [0, 0], sizes = [50, 1], strides = [1, 1]} : vector<50x4xf32> to vector<50x1xf32>
    %9 = vector.extract_strided_slice %7 {offsets = [0, 0], sizes = [1, 128], strides = [1, 1]} : vector<4x128xf32> to vector<1x128xf32>
    %10 = vector.broadcast %8 : vector<50x1xf32> to vector<50x128xf32>
    %11 = vector.broadcast %9 : vector<1x128xf32> to vector<50x128xf32>
    %12 = arith.mulf %10, %11 : vector<50x128xf32>
    %13 = vector.extract_strided_slice %0 {offsets = [0, 1], sizes = [50, 1], strides = [1, 1]} : vector<50x4xf32> to vector<50x1xf32>
    %14 = vector.extract_strided_slice %7 {offsets = [1, 0], sizes = [1, 128], strides = [1, 1]} : vector<4x128xf32> to vector<1x128xf32>
    %15 = vector.broadcast %13 : vector<50x1xf32> to vector<50x128xf32>
    %16 = vector.broadcast %14 : vector<1x128xf32> to vector<50x128xf32>
    %17 = arith.mulf %15, %16 : vector<50x128xf32>
    %18 = arith.addf %12, %17 : vector<50x128xf32>
    %19 = vector.extract_strided_slice %0 {offsets = [0, 2], sizes = [50, 1], strides = [1, 1]} : vector<50x4xf32> to vector<50x1xf32>
    %20 = vector.extract_strided_slice %7 {offsets = [2, 0], sizes = [1, 128], strides = [1, 1]} : vector<4x128xf32> to vector<1x128xf32>
    %21 = vector.broadcast %19 : vector<50x1xf32> to vector<50x128xf32>
    %22 = vector.broadcast %20 : vector<1x128xf32> to vector<50x128xf32>
    %23 = arith.mulf %21, %22 : vector<50x128xf32>
    %24 = arith.addf %18, %23 : vector<50x128xf32>
    %25 = vector.extract_strided_slice %0 {offsets = [0, 3], sizes = [50, 1], strides = [1, 1]} : vector<50x4xf32> to vector<50x1xf32>
    %26 = vector.extract_strided_slice %7 {offsets = [3, 0], sizes = [1, 128], strides = [1, 1]} : vector<4x128xf32> to vector<1x128xf32>
    %27 = vector.broadcast %25 : vector<50x1xf32> to vector<50x128xf32>
    %28 = vector.broadcast %26 : vector<1x128xf32> to vector<50x128xf32>
    %29 = arith.mulf %27, %28 : vector<50x128xf32>
    %30 = arith.addf %24, %29 : vector<50x128xf32>
    %31 = vector.broadcast %1 : vector<50x1xf32> to vector<50x128xf32>
    %32 = arith.addf %30, %31 : vector<50x128xf32>
    %cst = arith.constant 0.000000e+00 : f32
    %33 = vector.broadcast %cst : f32 to vector<50x128xf32>
    %34 = arith.maximumf %32, %33 : vector<50x128xf32>
    %35 = vector.extract_strided_slice %2 {offsets = [0, 0], sizes = [50, 1], strides = [1, 1]} : vector<50x2xf32> to vector<50x1xf32>
    %36 = vector.broadcast %35 : vector<50x1xf32> to vector<50x128xf32>
    %37 = arith.mulf %36, %34 : vector<50x128xf32>
    %cst_8 = arith.constant dense<0.000000e+00> : vector<128xf32>
    %38 = vector.multi_reduction <add>, %37, %cst_8 [0] : vector<50x128xf32> to vector<128xf32>
    %39 = vector.shape_cast %38 : vector<128xf32> to vector<1x128xf32>
    %40 = vector.extract_strided_slice %2 {offsets = [0, 1], sizes = [50, 1], strides = [1, 1]} : vector<50x2xf32> to vector<50x1xf32>
    %41 = vector.broadcast %40 : vector<50x1xf32> to vector<50x128xf32>
    %42 = arith.mulf %41, %34 : vector<50x128xf32>
    %cst_9 = arith.constant dense<0.000000e+00> : vector<128xf32>
    %43 = vector.multi_reduction <add>, %42, %cst_9 [0] : vector<50x128xf32> to vector<128xf32>
    %44 = vector.shape_cast %43 : vector<128xf32> to vector<1x128xf32>
    %45 = tpu.concatenate %39, %44 in 0 : vector<1x128xf32>, vector<1x128xf32> -> vector<2x128xf32>
    %46 = vector.broadcast %3 : vector<2x1xf32> to vector<2x128xf32>
    %47 = arith.addf %45, %46 : vector<2x128xf32>
    %c0_10 = arith.constant 0 : index
    %48 = arith.index_cast %5 : i32 to index
    %49 = vector.load %arg6[%c0_10, %48] : memref<2x128xf32, #tpu.memory_space<vmem>>, vector<2x128xf32>
    tpu.vector_store %arg6[%c0_10, %48], %47 {strides = array<i32>} : memref<2x128xf32, #tpu.memory_space<vmem>>, vector<2x128xf32>,
    %c1_i32 = arith.constant 1 : i32
    return
  }
  func.func @transform_0(%arg0: i32) -> (i32, i32) {
    %c0_i32 = arith.constant 0 : i32
    %c0_i32_0 = arith.constant 0 : i32
    return %c0_i32, %arg0 : i32, i32
  }
  func.func @transform_1(%arg0: i32) -> (i32, i32) {
    %c0_i32 = arith.constant 0 : i32
    %c0_i32_0 = arith.constant 0 : i32
    %c0_i32_1 = arith.constant 0 : i32
    return %c0_i32, %c0_i32_0 : i32, i32
  }
  func.func @transform_2(%arg0: i32) -> (i32, i32) {
    %c0_i32 = arith.constant 0 : i32
    %c0_i32_0 = arith.constant 0 : i32
    %c0_i32_1 = arith.constant 0 : i32
    return %c0_i32, %c0_i32_0 : i32, i32
  }
  func.func @transform_3(%arg0: i32) -> (i32, i32) {
    %c0_i32 = arith.constant 0 : i32
    %c0_i32_0 = arith.constant 0 : i32
    %c0_i32_1 = arith.constant 0 : i32
    return %c0_i32, %c0_i32_0 : i32, i32
  }
  func.func @transform_4(%arg0: i32) -> (i32, i32) {
    %c0_i32 = arith.constant 0 : i32
    %c0_i32_0 = arith.constant 0 : i32
    %c0_i32_1 = arith.constant 0 : i32
    return %c0_i32, %c0_i32_0 : i32, i32
  }
  func.func @transform_5(%arg0: i32) -> (i32, i32) {
    %c0_i32 = arith.constant 0 : i32
    %c0_i32_0 = arith.constant 0 : i32
    return %c0_i32, %arg0 : i32, i32
  }
}

</mosaic_0001>

<llo_original>
// kernel: net_forward.2
$region0: #{net_forward.2}
  #allocation0 [shape = 'u32[]', space=smem, size = 0x4, offset = 0x4, fixed_abs, tag = 'smem constant byte address 0x4 - core index']
  #allocation1 [shape = 'u32[72,128]{1,0:T(1,128)}', space=vmem, size = 0x9000, scoped, tag = 'internal scratch']
  #allocation2 [shape = 'u32[2048]{0}', space=vmem, size = 0x2000, scoped, tag = 'scoped memory for net_forward.2']
  #allocation3 [shape = 'u32[2048]{0}', space=vmem, size = 0x2000, scoped, tag = 'scoped memory for net_forward.2']
  #allocation4 [shape = 'u32[2048]{0}', space=vmem, size = 0x2000, scoped, tag = 'scoped memory for net_forward.2']
  #allocation5 [shape = 'u32[2048]{0}', space=vmem, size = 0x2000, scoped, tag = 'scoped memory for net_forward.2']
  #allocation6 [shape = 'u32[2048]{0}', space=vmem, size = 0x2000, scoped, tag = 'scoped memory for net_forward.2']
  %s0 = inlined_call_operand.vmem [shape: f32[50,4], index: 0, kind: input, shape index: {}]
  %s1 = inlined_call_operand.vmem [shape: f32[50,1], index: 1, kind: input, shape index: {}]
  %s2 = inlined_call_operand.vmem [shape: f32[50,2], index: 2, kind: input, shape index: {}]
  %s3 = inlined_call_operand.vmem [shape: f32[2,1], index: 3, kind: input, shape index: {}]
  %s4 = inlined_call_operand.vmem [shape: f32[2,4], index: 4, kind: input, shape index: {}]
  %s5 = inlined_call_operand.<no memory space> [shape: f32[], index: 5, kind: input, shape index: {}]
  %s6 = inlined_call_operand.vmem [shape: f32[2,128], index: 6, kind: output, shape index: {}]
  %s7 = sld [smem:[#allocation0]]
  $region30: #{net_forward.2} parent=0
    _
  %s9 = ssub.s32 1, %s7
  %s10 = scalar_select 0, %s9, %s7
  %v11 = vstv %s5
  $region1: #{net_forward.2} parent=0
    #allocation7 [shape = 'u8[2048]{0}', space=vmem, size = 0x800, dematerialized = true, scoped, tag = 'FusionAdapter Buffer %fusion.1 = f32[4,128]{1,0:T(4,128)} fusion(%param_4.2, %param_5), kind=kLoop, calls=%fused_computation.1.clone, metadata={op_name="jit(net_forward)/transpose" stack_frame_id=8}']
    // Predicated region
    $region2: #{net_forward.2} parent=1 // pred_check
      _
    $region3: #{net_forward.2} parent=1 // pred_check_branch
      %13 = sbr.rel (0) target = $region5
    $region4: #{net_forward.2} parent=1 // pred_region
      _
    $region5: #{net_forward.2} parent=1 // pred_fallthru
      _
    // Predicated region
    $region6: #{net_forward.2} parent=1 // pred_check
      _
    $region7: #{net_forward.2} parent=1 // pred_check_branch
      %15 = sbr.rel (0) target = $region9
    $region8: #{net_forward.2} parent=1 // pred_region
      _
    $region9: #{net_forward.2} parent=1 // pred_fallthru
      _
    // Predicated region
    $region10: #{net_forward.2} parent=1 // pred_check
      _
    $region11: #{net_forward.2} parent=1 // pred_check_branch
      %17 = sbr.rel (0) target = $region13
    $region12: #{net_forward.2} parent=1 // pred_region
      _
    $region13: #{net_forward.2} parent=1 // pred_fallthru
      _
    // Predicated region
    $region14: #{net_forward.2} parent=1 // pred_check
      _
    $region15: #{net_forward.2} parent=1 // pred_check_branch
      %19 = sbr.rel (0) target = $region17
    $region16: #{net_forward.2} parent=1 // pred_region
      _
    $region17: #{net_forward.2} parent=1 // pred_fallthru
      _
    // Predicated region
    $region18: #{net_forward.2} parent=1 // pred_check
      _
    $region19: #{net_forward.2} parent=1 // pred_check_branch
      %21 = sbr.rel (0) target = $region21
    $region20: #{net_forward.2} parent=1 // pred_region
      _
    $region21: #{net_forward.2} parent=1 // pred_fallthru
      _
    %v22 = vld [vmem:[%s4] sm:$0xf]
    %v23 = vlaneseq
    %v24 = vshrl.u32 %v23, 7
    %vm26 = vcmp.lt.s32.totalorder %v24, 4
    %v27 = vsel %vm26, %v22, %v11
    %v28 = vlaneseq
    %v29 = vand.u32 %v28, 127
    %vm31 = vcmp.lt.s32.totalorder %v29, 2
    %v32 = vsel %vm31, %v27, %v11
    %s34 = ssub.s32 16, 1
    %35 = vst [vmem:[#allocation7] sm:%s34] %v32
    %v36 = vld [vmem:[%s0] sm:$0xff]
    %v37 = vld [vmem:[%s0 + $0x8] sm:$0xff]
    %v38 = vld [vmem:[%s0 + $0x10] sm:$0xff]
    %v39 = vld [vmem:[%s0 + $0x18] sm:$0xff]
    %v40 = vld [vmem:[%s0 + $0x20] sm:$0xff]
    %v41 = vld [vmem:[%s0 + $0x28] sm:$0xff]
    %v42 = vld [vmem:[%s0 + $0x30] sm:$0x3]
    %v43 = vld [vmem:[%s1] sm:$0xff]
    %v44 = vld [vmem:[%s1 + $0x8] sm:$0xff]
    %v45 = vld [vmem:[%s1 + $0x10] sm:$0xff]
    %v46 = vld [vmem:[%s1 + $0x18] sm:$0xff]
    %v47 = vld [vmem:[%s1 + $0x20] sm:$0xff]
    %v48 = vld [vmem:[%s1 + $0x28] sm:$0xff]
    %v49 = vld [vmem:[%s1 + $0x30] sm:$0x3]
    %v50 = vld [vmem:[%s2] sm:$0xff]
    %v51 = vld [vmem:[%s2 + $0x8] sm:$0xff]
    %v52 = vld [vmem:[%s2 + $0x10] sm:$0xff]
    %v53 = vld [vmem:[%s2 + $0x18] sm:$0xff]
    %v54 = vld [vmem:[%s2 + $0x20] sm:$0xff]
    %v55 = vld [vmem:[%s2 + $0x28] sm:$0xff]
    %v56 = vld [vmem:[%s2 + $0x30] sm:$0x3]
    %v57 = vld [vmem:[%s3] sm:$0x3]
    %v58 = vld [vmem:[#allocation7] sm:$0xf]
    %60 = vset.pattern.permute.xlu0 0
    %61 = vperm.xlu0 %60, %v36
    %v62 = vpop.permute.xlu0 %61
    %65 = vset.pattern.permute.xlu0 0
    %66 = vperm.xlu0 %65, %v37
    %v67 = vpop.permute.xlu0 %66
    %70 = vset.pattern.permute.xlu0 0
    %71 = vperm.xlu0 %70, %v38
    %v72 = vpop.permute.xlu0 %71
    %75 = vset.pattern.permute.xlu0 0
    %76 = vperm.xlu0 %75, %v39
    %v77 = vpop.permute.xlu0 %76
    %80 = vset.pattern.permute.xlu0 0
    %81 = vperm.xlu0 %80, %v40
    %v82 = vpop.permute.xlu0 %81
    %85 = vset.pattern.permute.xlu0 0
    %86 = vperm.xlu0 %85, %v41
    %v87 = vpop.permute.xlu0 %86
    %90 = vset.pattern.permute.xlu0 0
    %91 = vperm.xlu0 %90, %v42
    %v92 = vpop.permute.xlu0 %91
    %v94 = vperm.slane %v58, 0
    %v95 = vmul.f32 %v62, %v94
    %v96 = vmul.f32 %v67, %v94
    %v97 = vmul.f32 %v72, %v94
    %v98 = vmul.f32 %v77, %v94
    %v99 = vmul.f32 %v82, %v94
    %v100 = vmul.f32 %v87, %v94
    %v101 = vmul.f32 %v92, %v94
    %102 = vset.pattern.permute.xlu0 1
    %103 = vperm.xlu0 %102, %v36
    %v104 = vpop.permute.xlu0 %103
    %106 = vset.pattern.permute.xlu0 1
    %107 = vperm.xlu0 %106, %v37
    %v108 = vpop.permute.xlu0 %107
    %110 = vset.pattern.permute.xlu0 1
    %111 = vperm.xlu0 %110, %v38
    %v112 = vpop.permute.xlu0 %111
    %114 = vset.pattern.permute.xlu0 1
    %115 = vperm.xlu0 %114, %v39
    %v116 = vpop.permute.xlu0 %115
    %118 = vset.pattern.permute.xlu0 1
    %119 = vperm.xlu0 %118, %v40
    %v120 = vpop.permute.xlu0 %119
    %122 = vset.pattern.permute.xlu0 1
    %123 = vperm.xlu0 %122, %v41
    %v124 = vpop.permute.xlu0 %123
    %126 = vset.pattern.permute.xlu0 1
    %127 = vperm.xlu0 %126, %v42
    %v128 = vpop.permute.xlu0 %127
    %v130 = vperm.slane %v58, 1
    %v131 = vmul.f32 %v104, %v130
    %v132 = vmul.f32 %v108, %v130
    %v133 = vmul.f32 %v112, %v130
    %v134 = vmul.f32 %v116, %v130
    %v135 = vmul.f32 %v120, %v130
    %v136 = vmul.f32 %v124, %v130
    %v137 = vmul.f32 %v128, %v130
    %v138 = vadd.f32 %v95, %v131
    %v139 = vadd.f32 %v96, %v132
    %v140 = vadd.f32 %v97, %v133
    %v141 = vadd.f32 %v98, %v134
    %v142 = vadd.f32 %v99, %v135
    %v143 = vadd.f32 %v100, %v136
    %v144 = vadd.f32 %v101, %v137
    %145 = vset.pattern.permute.xlu0 2
    %146 = vperm.xlu0 %145, %v36
    %v147 = vpop.permute.xlu0 %146
    %149 = vset.pattern.permute.xlu0 2
    %150 = vperm.xlu0 %149, %v37
    %v151 = vpop.permute.xlu0 %150
    %153 = vset.pattern.permute.xlu0 2
    %154 = vperm.xlu0 %153, %v38
    %v155 = vpop.permute.xlu0 %154
    %157 = vset.pattern.permute.xlu0 2
    %158 = vperm.xlu0 %157, %v39
    %v159 = vpop.permute.xlu0 %158
    %161 = vset.pattern.permute.xlu0 2
    %162 = vperm.xlu0 %161, %v40
    %v163 = vpop.permute.xlu0 %162
    %165 = vset.pattern.permute.xlu0 2
    %166 = vperm.xlu0 %165, %v41
    %v167 = vpop.permute.xlu0 %166
    %169 = vset.pattern.permute.xlu0 2
    %170 = vperm.xlu0 %169, %v42
    %v171 = vpop.permute.xlu0 %170
    %v173 = vperm.slane %v58, 2
    %v174 = vmul.f32 %v147, %v173
    %v175 = vmul.f32 %v151, %v173
    %v176 = vmul.f32 %v155, %v173
    %v177 = vmul.f32 %v159, %v173
    %v178 = vmul.f32 %v163, %v173
    %v179 = vmul.f32 %v167, %v173
    %v180 = vmul.f32 %v171, %v173
    %v181 = vadd.f32 %v138, %v174
    %v182 = vadd.f32 %v139, %v175
    %v183 = vadd.f32 %v140, %v176
    %v184 = vadd.f32 %v141, %v177
    %v185 = vadd.f32 %v142, %v178
    %v186 = vadd.f32 %v143, %v179
    %v187 = vadd.f32 %v144, %v180
    %188 = vset.pattern.permute.xlu0 3
    %189 = vperm.xlu0 %188, %v36
    %v190 = vpop.permute.xlu0 %189
    %192 = vset.pattern.permute.xlu0 3
    %193 = vperm.xlu0 %192, %v37
    %v194 = vpop.permute.xlu0 %193
    %196 = vset.pattern.permute.xlu0 3
    %197 = vperm.xlu0 %196, %v38
    %v198 = vpop.permute.xlu0 %197
    %200 = vset.pattern.permute.xlu0 3
    %201 = vperm.xlu0 %200, %v39
    %v202 = vpop.permute.xlu0 %201
    %204 = vset.pattern.permute.xlu0 3
    %205 = vperm.xlu0 %204, %v40
    %v206 = vpop.permute.xlu0 %205
    %208 = vset.pattern.permute.xlu0 3
    %209 = vperm.xlu0 %208, %v41
    %v210 = vpop.permute.xlu0 %209
    %212 = vset.pattern.permute.xlu0 3
    %213 = vperm.xlu0 %212, %v42
    %v214 = vpop.permute.xlu0 %213
    %v216 = vperm.slane %v58, 3
    %v217 = vmul.f32 %v190, %v216
    %v218 = vmul.f32 %v194, %v216
    %v219 = vmul.f32 %v198, %v216
    %v220 = vmul.f32 %v202, %v216
    %v221 = vmul.f32 %v206, %v216
    %v222 = vmul.f32 %v210, %v216
    %v223 = vmul.f32 %v214, %v216
    %v224 = vadd.f32 %v181, %v217
    %v225 = vadd.f32 %v182, %v218
    %v226 = vadd.f32 %v183, %v219
    %v227 = vadd.f32 %v184, %v220
    %v228 = vadd.f32 %v185, %v221
    %v229 = vadd.f32 %v186, %v222
    %v230 = vadd.f32 %v187, %v223
    %232 = vset.pattern.permute.xlu0 0
    %233 = vperm.xlu0 %232, %v43
    %v234 = vpop.permute.xlu0 %233
    %237 = vset.pattern.permute.xlu0 0
    %238 = vperm.xlu0 %237, %v44
    %v239 = vpop.permute.xlu0 %238
    %242 = vset.pattern.permute.xlu0 0
    %243 = vperm.xlu0 %242, %v45
    %v244 = vpop.permute.xlu0 %243
    %247 = vset.pattern.permute.xlu0 0
    %248 = vperm.xlu0 %247, %v46
    %v249 = vpop.permute.xlu0 %248
    %252 = vset.pattern.permute.xlu0 0
    %253 = vperm.xlu0 %252, %v47
    %v254 = vpop.permute.xlu0 %253
    %257 = vset.pattern.permute.xlu0 0
    %258 = vperm.xlu0 %257, %v48
    %v259 = vpop.permute.xlu0 %258
    %262 = vset.pattern.permute.xlu0 0
    %263 = vperm.xlu0 %262, %v49
    %v264 = vpop.permute.xlu0 %263
    %v266 = vadd.f32 %v224, %v234
    %v267 = vadd.f32 %v225, %v239
    %v268 = vadd.f32 %v226, %v244
    %v269 = vadd.f32 %v227, %v249
    %v270 = vadd.f32 %v228, %v254
    %v271 = vadd.f32 %v229, %v259
    %v272 = vadd.f32 %v230, %v264
    %v273 = vmax.f32 %v266, 0.0
    %v274 = vmax.f32 %v267, 0.0
    %v275 = vmax.f32 %v268, 0.0
    %v276 = vmax.f32 %v269, 0.0
    %v277 = vmax.f32 %v270, 0.0
    %v278 = vmax.f32 %v271, 0.0
    %v279 = vmax.f32 %v272, 0.0
    %281 = vset.pattern.permute.xlu0 0
    %282 = vperm.xlu0 %281, %v50
    %v283 = vpop.permute.xlu0 %282
    %286 = vset.pattern.permute.xlu0 0
    %287 = vperm.xlu0 %286, %v51
    %v288 = vpop.permute.xlu0 %287
    %291 = vset.pattern.permute.xlu0 0
    %292 = vperm.xlu0 %291, %v52
    %v293 = vpop.permute.xlu0 %292
    %296 = vset.pattern.permute.xlu0 0
    %297 = vperm.xlu0 %296, %v53
    %v298 = vpop.permute.xlu0 %297
    %301 = vset.pattern.permute.xlu0 0
    %302 = vperm.xlu0 %301, %v54
    %v303 = vpop.permute.xlu0 %302
    %306 = vset.pattern.permute.xlu0 0
    %307 = vperm.xlu0 %306, %v55
    %v308 = vpop.permute.xlu0 %307
    %311 = vset.pattern.permute.xlu0 0
    %312 = vperm.xlu0 %311, %v56
    %v313 = vpop.permute.xlu0 %312
    %v315 = vmul.f32 %v283, %v273
    %v316 = vmul.f32 %v288, %v274
    %v317 = vmul.f32 %v293, %v275
    %v318 = vmul.f32 %v298, %v276
    %v319 = vmul.f32 %v303, %v277
    %v320 = vmul.f32 %v308, %v278
    %v321 = vmul.f32 %v313, %v279
    %v322 = vadd.f32 %v315, %v316
    %v323 = vadd.f32 %v322, %v317
    %v324 = vadd.f32 %v323, %v318
    %v325 = vadd.f32 %v324, %v319
    %v326 = vadd.f32 %v325, %v320
    %vm327 = vcmask 1041408
    %v328 = vsel %vm327, %v321, 0.0
    %v329 = vadd.f32 %v326, %v328
    %v330 = vrot.slane %v329, 4
    %v331 = vadd.f32 %v329, %v330
    %v332 = vrot.slane %v331, 2
    %v333 = vadd.f32 %v331, %v332
    %v334 = vrot.slane %v333, 1
    %v335 = vadd.f32 %v333, %v334
    %336 = vset.pattern.permute.xlu0 1
    %337 = vperm.xlu0 %336, %v50
    %v338 = vpop.permute.xlu0 %337
    %340 = vset.pattern.permute.xlu0 1
    %341 = vperm.xlu0 %340, %v51
    %v342 = vpop.permute.xlu0 %341
    %344 = vset.pattern.permute.xlu0 1
    %345 = vperm.xlu0 %344, %v52
    %v346 = vpop.permute.xlu0 %345
    %348 = vset.pattern.permute.xlu0 1
    %349 = vperm.xlu0 %348, %v53
    %v350 = vpop.permute.xlu0 %349
    %352 = vset.pattern.permute.xlu0 1
    %353 = vperm.xlu0 %352, %v54
    %v354 = vpop.permute.xlu0 %353
    %356 = vset.pattern.permute.xlu0 1
    %357 = vperm.xlu0 %356, %v55
    %v358 = vpop.permute.xlu0 %357
    %360 = vset.pattern.permute.xlu0 1
    %361 = vperm.xlu0 %360, %v56
    %v362 = vpop.permute.xlu0 %361
    %v364 = vmul.f32 %v338, %v273
    %v365 = vmul.f32 %v342, %v274
    %v366 = vmul.f32 %v346, %v275
    %v367 = vmul.f32 %v350, %v276
    %v368 = vmul.f32 %v354, %v277
    %v369 = vmul.f32 %v358, %v278
    %v370 = vmul.f32 %v362, %v279
    %v371 = vadd.f32 %v364, %v365
    %v372 = vadd.f32 %v371, %v366
    %v373 = vadd.f32 %v372, %v367
    %v374 = vadd.f32 %v373, %v368
    %v375 = vadd.f32 %v374, %v369
    %v376 = vsel %vm327, %v370, 0.0
    %v377 = vadd.f32 %v375, %v376
    %v378 = vrot.slane %v377, 4
    %v379 = vadd.f32 %v377, %v378
    %v380 = vrot.slane %v379, 2
    %v381 = vadd.f32 %v379, %v380
    %v382 = vrot.slane %v381, 1
    %v383 = vadd.f32 %v381, %v382
    %vm384 = vcmask 1040384
    %v385 = vsel %vm384, %v335, %v383
    %387 = vset.pattern.permute.xlu0 0
    %388 = vperm.xlu0 %387, %v57
    %v389 = vpop.permute.xlu0 %388
    %v391 = vadd.f32 %v385, %v389
    %392 = vst [vmem:[%s6] sm:$0x3] %v391
    // Predicated region
    $region22: #{net_forward.2} parent=1 // pred_check
      _
    $region23: #{net_forward.2} parent=1 // pred_check_branch
      %394 = sbr.rel (0) target = $region25
    $region24: #{net_forward.2} parent=1 // pred_region
      _
    $region25: #{net_forward.2} parent=1 // pred_fallthru
      _
    // Predicated region
    $region26: #{net_forward.2} parent=1 // pred_check
      _
    $region27: #{net_forward.2} parent=1 // pred_check_branch
      %396 = sbr.rel (0) target = $region29
    $region28: #{net_forward.2} parent=1 // pred_region
      _
    $region29: #{net_forward.2} parent=1 // pred_fallthru
      _

</llo_original>
